<compile_context>
chip_gen: v7x
topology: tpu7x:2x2x1
jax: 0.10.0
libtpu: 0.0.40
codegen_flags: <defaults>
</compile_context>

<pallas_src>
import functools
import math

import jax
import jax.numpy as jnp
import numpy as np
from jax.experimental import pallas as pl
from jax.experimental.pallas import tpu as pltpu


def _self_output_kernel(x_ref, res_ref, w_ref, b_ref, gamma_ref, beta_ref,
                        o_ref, *, eps):
    x = x_ref[...]          # [tm, H]  rows of hidden_states
    res = res_ref[...]      # [tm, H]  rows of input_tensor (residual)
    w = w_ref[...]          # [H, H]   dense weight, already transposed (in, out)
    b = b_ref[...]          # [1, H]
    gamma = gamma_ref[...]  # [1, H]
    beta = beta_ref[...]    # [1, H]

    # Dense projection on the MXU, f32 accumulation.
    h = jnp.dot(x, w, preferred_element_type=jnp.float32) + b

    # TODO(synk): dropout omitted (eval mode / hidden_dropout_prob treated as 0).

    # Residual add, then LayerNorm over the hidden axis (PyTorch semantics:
    # biased variance, eps inside the sqrt).
    h = h + res
    mean = jnp.mean(h, axis=-1, keepdims=True)
    centered = h - mean
    var = jnp.mean(centered * centered, axis=-1, keepdims=True)
    inv = jax.lax.rsqrt(var + eps)               # EUP slot
    y = centered * inv * gamma + beta

    o_ref[...] = y.astype(o_ref.dtype)


def bert_self_output(hidden_states, input_tensor, w_t, b, gamma, beta,
                     *, eps=1e-12, row_tile=8):
    """Fused dense + residual + LayerNorm.

    hidden_states, input_tensor : [B, S, H]  (f32)
    w_t                         : [H, H]  dense weight transposed (in, out)
    b, gamma, beta              : [H]
    returns                     : [B, S, H]
    """
    B, S, H = hidden_states.shape
    M = B * S
    assert M % row_tile == 0, "B*S must be divisible by row_tile"

    x2 = hidden_states.reshape(M, H)
    r2 = input_tensor.reshape(M, H)
    b2 = b.reshape(1, H)
    g2 = gamma.reshape(1, H)
    be2 = beta.reshape(1, H)

    kernel = functools.partial(_self_output_kernel, eps=eps)

    row_map = lambda i: (i, 0)      # streamed activation rows
    const_map = lambda i: (0, 0)    # resident weight / vectors

    out = pl.pallas_call(
        kernel,
        out_shape=jax.ShapeDtypeStruct((M, H), jnp.float32),
        grid_spec=pltpu.PrefetchScalarGridSpec(
            num_scalar_prefetch=0,
            grid=(M // row_tile,),
            in_specs=[
                pl.BlockSpec((row_tile, H), row_map),   # hidden_states rows
                pl.BlockSpec((row_tile, H), row_map),   # residual rows
                pl.BlockSpec((H, H), const_map),        # W^T (resident)
                pl.BlockSpec((1, H), const_map),        # bias
                pl.BlockSpec((1, H), const_map),        # LayerNorm gamma
                pl.BlockSpec((1, H), const_map),        # LayerNorm beta
            ],
            out_specs=pl.BlockSpec((row_tile, H), row_map),
        ),
        compiler_params=pltpu.CompilerParams(
            dimension_semantics=("parallel",)),
    )(x2, r2, w_t, b2, g2, be2)

    return out.reshape(B, S, H)


def _reference(hidden_states, input_tensor, w_t, b, gamma, beta, eps=1e-12):
    """Pure-JAX mirror of the torch BertSelfOutput forward (dropout = identity)."""
    h = hidden_states @ w_t + b
    h = h + input_tensor
    mean = jnp.mean(h, axis=-1, keepdims=True)
    var = jnp.mean((h - mean) ** 2, axis=-1, keepdims=True)
    y = (h - mean) / jnp.sqrt(var + eps)
    return y * gamma + beta


if __name__ == "__main__":
    B, S, H = 2, 8, 32
    eps = 1e-12
    initializer_range = 0.02

    key = jax.random.PRNGKey(0)
    ks = jax.random.split(key, 6)

    hidden_states = jax.random.normal(ks[0], (B, S, H), jnp.float32)
    input_tensor = jax.random.normal(ks[1], (B, S, H), jnp.float32)

    # nn.Linear(H, H): weight [out, in]; we pass it transposed as [in, out].
    w = jax.random.normal(ks[2], (H, H), jnp.float32) * initializer_range
    w_t = w.T
    b = jax.random.normal(ks[3], (H,), jnp.float32) * initializer_range
    # LayerNorm affine params (torch init: gamma=1, beta=0; perturb for a real test).
    gamma = 1.0 + jax.random.normal(ks[4], (H,), jnp.float32) * 0.1
    beta = jax.random.normal(ks[5], (H,), jnp.float32) * 0.1

    out = bert_self_output(hidden_states, input_tensor, w_t, b, gamma, beta,
                           eps=eps, row_tile=8)
    out = jax.block_until_ready(out)

    ref = _reference(hidden_states, input_tensor, w_t, b, gamma, beta, eps=eps)
    np.testing.assert_allclose(np.asarray(out), np.asarray(ref),
                               rtol=1e-5, atol=1e-5)

    print("KERNEL_OK")
</pallas_src>

<mosaic_0001>
module attributes {stable_mosaic.version = 11 : i64} {
  func.func @_self_output_kernel(%arg0: i32, %arg1: memref<8x32xf32, #tpu.memory_space<vmem>>, %arg2: memref<8x32xf32, #tpu.memory_space<vmem>>, %arg3: memref<32x32xf32, #tpu.memory_space<vmem>>, %arg4: memref<1x32xf32, #tpu.memory_space<vmem>>, %arg5: memref<1x32xf32, #tpu.memory_space<vmem>>, %arg6: memref<1x32xf32, #tpu.memory_space<vmem>>, %arg7: memref<8x32xf32, #tpu.memory_space<vmem>>) attributes {dimension_semantics = [#tpu.dimension_semantics<parallel>], iteration_bounds = array<i64: 2>, scalar_prefetch = 0 : i64, scratch_operands = 0 : i64, tpu.core_type = #tpu.core_type<tc>, window_params = [{transform_indices = @transform_0, window_bounds = array<i64: 8, 32>}, {transform_indices = @transform_1, window_bounds = array<i64: 8, 32>}, {pipeline_mode = #tpu.pipeline_mode<synchronous>, transform_indices = @transform_2, window_bounds = array<i64: 32, 32>}, {pipeline_mode = #tpu.pipeline_mode<synchronous>, transform_indices = @transform_3, window_bounds = array<i64: 1, 32>}, {pipeline_mode = #tpu.pipeline_mode<synchronous>, transform_indices = @transform_4, window_bounds = array<i64: 1, 32>}, {pipeline_mode = #tpu.pipeline_mode<synchronous>, transform_indices = @transform_5, window_bounds = array<i64: 1, 32>}, {transform_indices = @transform_6, window_bounds = array<i64: 8, 32>}]} {
    %c0 = arith.constant 0 : index
    %c0_0 = arith.constant 0 : index
    %0 = vector.load %arg1[%c0, %c0_0] : memref<8x32xf32, #tpu.memory_space<vmem>>, vector<8x32xf32>
    %c0_1 = arith.constant 0 : index
    %c0_2 = arith.constant 0 : index
    %1 = vector.load %arg2[%c0_1, %c0_2] : memref<8x32xf32, #tpu.memory_space<vmem>>, vector<8x32xf32>
    %c0_3 = arith.constant 0 : index
    %c0_4 = arith.constant 0 : index
    %2 = vector.load %arg3[%c0_3, %c0_4] : memref<32x32xf32, #tpu.memory_space<vmem>>, vector<32x32xf32>
    %c0_5 = arith.constant 0 : index
    %c0_6 = arith.constant 0 : index
    %3 = vector.load %arg4[%c0_5, %c0_6] : memref<1x32xf32, #tpu.memory_space<vmem>>, vector<1x32xf32>
    %c0_7 = arith.constant 0 : index
    %c0_8 = arith.constant 0 : index
    %4 = vector.load %arg5[%c0_7, %c0_8] : memref<1x32xf32, #tpu.memory_space<vmem>>, vector<1x32xf32>
    %c0_9 = arith.constant 0 : index
    %c0_10 = arith.constant 0 : index
    %5 = vector.load %arg6[%c0_9, %c0_10] : memref<1x32xf32, #tpu.memory_space<vmem>>, vector<1x32xf32>
    %cst = arith.constant dense<0.000000e+00> : vector<8x32xf32>
    %6 = tpu.matmul %0, %2, %cst {dimension_numbers = #tpu.dot_dimension_numbers<[1], [0], [0], [1], [0, 0, 1, 1], [], []>} : vector<8x32xf32>, vector<32x32xf32>, vector<8x32xf32> -> vector<8x32xf32>
    %7 = vector.broadcast %3 : vector<1x32xf32> to vector<8x32xf32>
    %8 = arith.addf %6, %7 : vector<8x32xf32>
    %9 = arith.addf %8, %1 : vector<8x32xf32>
    %cst_11 = arith.constant dense<0.000000e+00> : vector<8xf32>
    %10 = vector.multi_reduction <add>, %9, %cst_11 [1] : vector<8x32xf32> to vector<8xf32>
    %11 = vector.shape_cast %10 : vector<8xf32> to vector<8x1xf32>
    %cst_12 = arith.constant 3.200000e+01 : f32
    %12 = vector.broadcast %cst_12 : f32 to vector<8x1xf32>
    %13 = arith.divf %11, %12 : vector<8x1xf32>
    %14 = vector.broadcast %13 : vector<8x1xf32> to vector<8x32xf32>
    %15 = arith.subf %9, %14 : vector<8x32xf32>
    %16 = arith.mulf %15, %15 : vector<8x32xf32>
    %cst_13 = arith.constant dense<0.000000e+00> : vector<8xf32>
    %17 = vector.multi_reduction <add>, %16, %cst_13 [1] : vector<8x32xf32> to vector<8xf32>
    %18 = vector.shape_cast %17 : vector<8xf32> to vector<8x1xf32>
    %cst_14 = arith.constant 3.200000e+01 : f32
    %19 = vector.broadcast %cst_14 : f32 to vector<8x1xf32>
    %20 = arith.divf %18, %19 : vector<8x1xf32>
    %cst_15 = arith.constant 9.99999996E-13 : f32
    %21 = vector.broadcast %cst_15 : f32 to vector<8x1xf32>
    %22 = arith.addf %20, %21 : vector<8x1xf32>
    %23 = math.rsqrt %22 : vector<8x1xf32>
    %24 = vector.broadcast %23 : vector<8x1xf32> to vector<8x32xf32>
    %25 = arith.mulf %15, %24 : vector<8x32xf32>
    %26 = vector.broadcast %4 : vector<1x32xf32> to vector<8x32xf32>
    %27 = arith.mulf %25, %26 : vector<8x32xf32>
    %28 = vector.broadcast %5 : vector<1x32xf32> to vector<8x32xf32>
    %29 = arith.addf %27, %28 : vector<8x32xf32>
    %c0_16 = arith.constant 0 : index
    %c0_17 = arith.constant 0 : index
    %30 = vector.load %arg7[%c0_16, %c0_17] : memref<8x32xf32, #tpu.memory_space<vmem>>, vector<8x32xf32>
    tpu.vector_store %arg7[%c0_16, %c0_17], %29 {strides = array<i32>} : memref<8x32xf32, #tpu.memory_space<vmem>>, vector<8x32xf32>,
    return
  }
  func.func @transform_0(%arg0: i32) -> (i32, i32) {
    %c0_i32 = arith.constant 0 : i32
    %c0_i32_0 = arith.constant 0 : i32
    return %arg0, %c0_i32 : i32, i32
  }
  func.func @transform_1(%arg0: i32) -> (i32, i32) {
    %c0_i32 = arith.constant 0 : i32
    %c0_i32_0 = arith.constant 0 : i32
    return %arg0, %c0_i32 : i32, i32
  }
  func.func @transform_2(%arg0: i32) -> (i32, i32) {
    %c0_i32 = arith.constant 0 : i32
    %c0_i32_0 = arith.constant 0 : i32
    %c0_i32_1 = arith.constant 0 : i32
    return %c0_i32, %c0_i32_0 : i32, i32
  }
  func.func @transform_3(%arg0: i32) -> (i32, i32) {
    %c0_i32 = arith.constant 0 : i32
    %c0_i32_0 = arith.constant 0 : i32
    %c0_i32_1 = arith.constant 0 : i32
    return %c0_i32, %c0_i32_0 : i32, i32
  }
  func.func @transform_4(%arg0: i32) -> (i32, i32) {
    %c0_i32 = arith.constant 0 : i32
    %c0_i32_0 = arith.constant 0 : i32
    %c0_i32_1 = arith.constant 0 : i32
    return %c0_i32, %c0_i32_0 : i32, i32
  }
  func.func @transform_5(%arg0: i32) -> (i32, i32) {
    %c0_i32 = arith.constant 0 : i32
    %c0_i32_0 = arith.constant 0 : i32
    %c0_i32_1 = arith.constant 0 : i32
    return %c0_i32, %c0_i32_0 : i32, i32
  }
  func.func @transform_6(%arg0: i32) -> (i32, i32) {
    %c0_i32 = arith.constant 0 : i32
    %c0_i32_0 = arith.constant 0 : i32
    return %arg0, %c0_i32 : i32, i32
  }
}

</mosaic_0001>

<llo_original>
// kernel: tpu_custom_call.1
$region0: #{tpu_custom_call.1}
  #allocation0 [shape = 'u32[]', space=smem, size = 0x4, offset = 0x4, fixed_abs, tag = 'smem constant byte address 0x4 - core index']
  #allocation1 [shape = 'u32[144,128]{1,0:T(1,128)}', space=vmem, size = 0x12000, scoped, tag = 'internal scratch']
  %s0 = inlined_call_operand.hbm [shape: f32[16,32], index: 0, kind: input, shape index: {}]
  %s1 = inlined_call_operand.hbm [shape: f32[16,32], index: 1, kind: input, shape index: {}]
  %s2 = inlined_call_operand.hbm [shape: f32[32,32], index: 2, kind: input, shape index: {}]
  %s3 = inlined_call_operand.vmem [shape: f32[1,32], index: 3, kind: input, shape index: {}]
  %s4 = inlined_call_operand.vmem [shape: f32[1,32], index: 4, kind: input, shape index: {}]
  %s5 = inlined_call_operand.vmem [shape: f32[1,32], index: 5, kind: input, shape index: {}]
  %s6 = inlined_call_operand.hbm [shape: f32[16,32], index: 6, kind: output, shape index: {}]
  %s7 = sld [smem:[#allocation0]]
  $region69: #{tpu_custom_call.1} parent=0
    _
  %s9 = ssub.s32 1, %s7
  %s10 = scalar_select 0, %s9, %s7
  $region1: #{tpu_custom_call.1} parent=0
    #allocation2 [shape = 'u8[8192]{0}', space=vmem, size = 0x2000, scoped, tag = 'input window, operand 0']
    #allocation3 [shape = 's32[2]{0}', space=sflag, size = 0x8, scoped, tag = 'scoped memory for tpu_custom_call.1']
    #allocation4 [shape = 's32[2]{0}', space=sflag, size = 0x8, scoped, tag = 'scoped memory for tpu_custom_call.1']
    #allocation5 [shape = 'u8[8192]{0}', space=vmem, size = 0x2000, scoped, tag = 'input window, operand 1']
    #allocation6 [shape = 's32[2]{0}', space=sflag, size = 0x8, scoped, tag = 'scoped memory for tpu_custom_call.1']
    #allocation7 [shape = 'u8[16384]{0}', space=vmem, size = 0x4000, scoped, tag = 'input window, operand 2, single buffered']
    #allocation8 [shape = 'u8[8192]{0}', space=vmem, size = 0x2000, scoped, tag = 'output window, operand 0']
    %11 = vsyncpa [#allocation3], 0
    %s12 = scalar_lea.sflag [#allocation3], 1
    %13 = vsyncpa %s12, 0
    %14 = vsyncpa [#allocation6], 0
    %s15 = scalar_lea.sflag [#allocation6], 1
    %16 = vsyncpa %s15, 0
    %17 = vsyncpa [#allocation4], 0
    %s18 = scalar_lea.sflag [#allocation4], 1
    %19 = vsyncpa %s18, 0
    loop: start=0, step=1, limit=4
    $region2: #{tpu_custom_call.1} parent=1 // loop_pre_header
      _
    $region3: #{tpu_custom_call.1} parent=1 // loop_header
      %s21 = sphi 0, %s25
      %p22 = scmp.ge.s32.totalorder %s21, 4
      %s31 = sphi 0, %s33
      %s34 = sphi 0, %s31
      %s35 = sphi 0, %s34
      %s51 = sphi 0, %s35
      %s57 = sphi 0, %s59
      %s60 = sphi 0, %s57
      %s61 = sphi 0, %s60
      %s77 = sphi 0, %s61
      %s81 = sphi 0, %s81
      %s83 = sphi 0, %s81
      %s84 = sphi 0, %s83
      %s98 = sphi 0, %s84
      %s102 = sphi 0, %s102
      %s104 = sphi 0, %s102
      %s105 = sphi 0, %s104
      %s119 = sphi 0, %s105
      %s123 = sphi 0, %s123
      %s125 = sphi 0, %s123
      %s126 = sphi 0, %s125
      %s140 = sphi 0, %s126
      %s144 = sphi 0, %s144
      %s146 = sphi 0, %s144
      %s147 = sphi 0, %s146
      %s161 = sphi 0, %s147
      %s167 = sphi 0, %s169
      %s170 = sphi 0, %s167
      %s171 = sphi 0, %s170
      %s187 = sphi 0, %s171
    $region4: #{tpu_custom_call.1} parent=1 // loop_header_branch
      %24 = sbr.rel (%p22) target = $region8
    $region5: #{tpu_custom_call.1} parent=1 // loop_body
      %s26 = ssub.s32 %s21, 1
      %s27 = ssub.s32 %s21, 2
      %s28 = sadd.s32 %s21, 1
      %s29 = ssub.s32 %s21, %s28
      %p30 = scmp.eq.s32.totalorder %s29, 0
      %s32 = sadd.s32 %s31, 1
      %s33 = scalar_select %p30, %s31, %s32
      %p36 = pneg %p30
      %p37 = scmp.eq.s32.totalorder %s21, 1
      %p38 = por %p36, %p37
      %p39 = scmp.ne.s32.totalorder %s31, %s34
      %p40 = scmp.eq.s32.totalorder %s21, 0
      %p41 = por %p39, %p40
      %p42 = scmp.ne.s32.totalorder %s31, %s34
      %p43 = scmp.eq.s32.totalorder %s26, 1
      %p44 = por %p42, %p43
      %p45 = scmp.ne.s32.totalorder %s34, %s35
      %p46 = scmp.eq.s32.totalorder %s26, 0
      %p47 = por %p45, %p46
      %p48 = scmp.ne.s32.totalorder %s34, %s35
      %p49 = scmp.eq.s32.totalorder %s27, 1
      %p50 = por %p48, %p49
      %p52 = scmp.ne.s32.totalorder %s35, %s51
      %p53 = scmp.eq.s32.totalorder %s27, 0
      %p54 = por %p52, %p53
      %s55 = ssub.s32 %s21, %s28
      %p56 = scmp.eq.s32.totalorder %s55, 0
      %s58 = sadd.s32 %s57, 1
      %s59 = scalar_select %p56, %s57, %s58
      %p62 = pneg %p56
      %p63 = scmp.eq.s32.totalorder %s21, 1
      %p64 = por %p62, %p63
      %p65 = scmp.ne.s32.totalorder %s57, %s60
      %p66 = scmp.eq.s32.totalorder %s21, 0
      %p67 = por %p65, %p66
      %p68 = scmp.ne.s32.totalorder %s57, %s60
      %p69 = scmp.eq.s32.totalorder %s26, 1
      %p70 = por %p68, %p69
      %p71 = scmp.ne.s32.totalorder %s60, %s61
      %p72 = scmp.eq.s32.totalorder %s26, 0
      %p73 = por %p71, %p72
      %p74 = scmp.ne.s32.totalorder %s60, %s61
      %p75 = scmp.eq.s32.totalorder %s27, 1
      %p76 = por %p74, %p75
      %p78 = scmp.ne.s32.totalorder %s61, %s77
      %p79 = scmp.eq.s32.totalorder %s27, 0
      %p80 = por %p78, %p79
      %s82 = sadd.s32 %s81, 1
      %p85 = scmp.eq.s32.totalorder %s21, 1
      %p86 = scmp.ne.s32.totalorder %s81, %s83
      %p87 = scmp.eq.s32.totalorder %s21, 0
      %p88 = por %p86, %p87
      %p89 = scmp.ne.s32.totalorder %s81, %s83
      %p90 = scmp.eq.s32.totalorder %s26, 1
      %p91 = por %p89, %p90
      %p92 = scmp.ne.s32.totalorder %s83, %s84
      %p93 = scmp.eq.s32.totalorder %s26, 0
      %p94 = por %p92, %p93
      %p95 = scmp.ne.s32.totalorder %s83, %s84
      %p96 = scmp.eq.s32.totalorder %s27, 1
      %p97 = por %p95, %p96
      %p99 = scmp.ne.s32.totalorder %s84, %s98
      %p100 = scmp.eq.s32.totalorder %s27, 0
      %p101 = por %p99, %p100
      %s103 = sadd.s32 %s102, 1
      %p106 = scmp.eq.s32.totalorder %s21, 1
      %p107 = scmp.ne.s32.totalorder %s102, %s104
      %p108 = scmp.eq.s32.totalorder %s21, 0
      %p109 = por %p107, %p108
      %p110 = scmp.ne.s32.totalorder %s102, %s104
      %p111 = scmp.eq.s32.totalorder %s26, 1
      %p112 = por %p110, %p111
      %p113 = scmp.ne.s32.totalorder %s104, %s105
      %p114 = scmp.eq.s32.totalorder %s26, 0
      %p115 = por %p113, %p114
      %p116 = scmp.ne.s32.totalorder %s104, %s105
      %p117 = scmp.eq.s32.totalorder %s27, 1
      %p118 = por %p116, %p117
      %p120 = scmp.ne.s32.totalorder %s105, %s119
      %p121 = scmp.eq.s32.totalorder %s27, 0
      %p122 = por %p120, %p121
      %s124 = sadd.s32 %s123, 1
      %p127 = scmp.eq.s32.totalorder %s21, 1
      %p128 = scmp.ne.s32.totalorder %s123, %s125
      %p129 = scmp.eq.s32.totalorder %s21, 0
      %p130 = por %p128, %p129
      %p131 = scmp.ne.s32.totalorder %s123, %s125
      %p132 = scmp.eq.s32.totalorder %s26, 1
      %p133 = por %p131, %p132
      %p134 = scmp.ne.s32.totalorder %s125, %s126
      %p135 = scmp.eq.s32.totalorder %s26, 0
      %p136 = por %p134, %p135
      %p137 = scmp.ne.s32.totalorder %s125, %s126
      %p138 = scmp.eq.s32.totalorder %s27, 1
      %p139 = por %p137, %p138
      %p141 = scmp.ne.s32.totalorder %s126, %s140
      %p142 = scmp.eq.s32.totalorder %s27, 0
      %p143 = por %p141, %p142
      %s145 = sadd.s32 %s144, 1
      %p148 = scmp.eq.s32.totalorder %s21, 1
      %p149 = scmp.ne.s32.totalorder %s144, %s146
      %p150 = scmp.eq.s32.totalorder %s21, 0
      %p151 = por %p149, %p150
      %p152 = scmp.ne.s32.totalorder %s144, %s146
      %p153 = scmp.eq.s32.totalorder %s26, 1
      %p154 = por %p152, %p153
      %p155 = scmp.ne.s32.totalorder %s146, %s147
      %p156 = scmp.eq.s32.totalorder %s26, 0
      %p157 = por %p155, %p156
      %p158 = scmp.ne.s32.totalorder %s146, %s147
      %p159 = scmp.eq.s32.totalorder %s27, 1
      %p160 = por %p158, %p159
      %p162 = scmp.ne.s32.totalorder %s147, %s161
      %p163 = scmp.eq.s32.totalorder %s27, 0
      %p164 = por %p162, %p163
      %s165 = ssub.s32 %s21, %s28
      %p166 = scmp.eq.s32.totalorder %s165, 0
      %s168 = sadd.s32 %s167, 1
      %s169 = scalar_select %p166, %s167, %s168
      %p172 = pneg %p166
      %p173 = scmp.eq.s32.totalorder %s21, 1
      %p174 = por %p172, %p173
      %p175 = scmp.ne.s32.totalorder %s167, %s170
      %p176 = scmp.eq.s32.totalorder %s21, 0
      %p177 = por %p175, %p176
      %p178 = scmp.ne.s32.totalorder %s167, %s170
      %p179 = scmp.eq.s32.totalorder %s26, 1
      %p180 = por %p178, %p179
      %p181 = scmp.ne.s32.totalorder %s170, %s171
      %p182 = scmp.eq.s32.totalorder %s26, 0
      %p183 = por %p181, %p182
      %p184 = scmp.ne.s32.totalorder %s170, %s171
      %p185 = scmp.eq.s32.totalorder %s27, 1
      %p186 = por %p184, %p185
      %p188 = scmp.ne.s32.totalorder %s171, %s187
      %p189 = scmp.eq.s32.totalorder %s27, 0
      %p190 = por %p188, %p189
      %p191 = scmp.le.s32.totalorder 1, %s21
      %p192 = scmp.lt.s32.totalorder %s21, 3
      %p193 = pnand %p191, %p192
      %p194 = pneg %p193
      // Predicated region
      $region9: #{tpu_custom_call.1} parent=5 // pred_check
        _
      $region10: #{tpu_custom_call.1} parent=5 // pred_check_branch
        %196 = sbr.rel (%p193) target = $region12
      $region11: #{tpu_custom_call.1} parent=5 // pred_region
        %s197 = ssub.s32 %s21, 1
        // Predicated region
        $region13: #{tpu_custom_call.1} parent=11 // pred_check
          %p198 = pneg %p94
        $region14: #{tpu_custom_call.1} parent=11 // pred_check_branch
          %200 = sbr.rel (%p198) target = $region16
        $region15: #{tpu_custom_call.1} parent=11 // pred_region
          %s202 = ssub.s32 512, 512
          %203 = vsyncadd [#allocation6], %s202
          %s204 = sshll.u32 [#allocation7], 4
          %s205 = int_to_ptr.vmem [resolvable:$true] %s204
          %210 = dma.hbm_to_vmem [thread:$0]  %s2, 512, %s205, [#allocation6], 128, 128, 8
        $region16: #{tpu_custom_call.1} parent=11 // pred_fallthru
          _
        // Predicated region
        $region17: #{tpu_custom_call.1} parent=11 // pred_check
          %p211 = pneg %p115
        $region18: #{tpu_custom_call.1} parent=11 // pred_check_branch
          %213 = sbr.rel (%p211) target = $region20
        $region19: #{tpu_custom_call.1} parent=11 // pred_region
          _
        $region20: #{tpu_custom_call.1} parent=11 // pred_fallthru
          _
        // Predicated region
        $region21: #{tpu_custom_call.1} parent=11 // pred_check
          %p214 = pneg %p136
        $region22: #{tpu_custom_call.1} parent=11 // pred_check_branch
          %216 = sbr.rel (%p214) target = $region24
        $region23: #{tpu_custom_call.1} parent=11 // pred_region
          _
        $region24: #{tpu_custom_call.1} parent=11 // pred_fallthru
          _
        // Predicated region
        $region25: #{tpu_custom_call.1} parent=11 // pred_check
          %p217 = pneg %p157
        $region26: #{tpu_custom_call.1} parent=11 // pred_check_branch
          %219 = sbr.rel (%p217) target = $region28
        $region27: #{tpu_custom_call.1} parent=11 // pred_region
          _
        $region28: #{tpu_custom_call.1} parent=11 // pred_fallthru
          _
      $region12: #{tpu_custom_call.1} parent=5 // pred_fallthru
        _
      %p220 = scmp.lt.s32.totalorder %s21, 2
      // Predicated region
      $region29: #{tpu_custom_call.1} parent=5 // pred_check
        %p221 = pneg %p220
      $region30: #{tpu_custom_call.1} parent=5 // pred_check_branch
        %223 = sbr.rel (%p221) target = $region32
      $region31: #{tpu_custom_call.1} parent=5 // pred_region
        // Predicated region
        $region33: #{tpu_custom_call.1} parent=31 // pred_check
          %p224 = pneg %p41
        $region34: #{tpu_custom_call.1} parent=31 // pred_check_branch
          %226 = sbr.rel (%p224) target = $region36
        $region35: #{tpu_custom_call.1} parent=31 // pred_region
          %s227 = sand.u32 %s31, 1
          %s228 = scalar_lea.sflag [#allocation3], %s227
          %s229 = sand.u32 %s31, 1
          %s230 = smul.addr %s229, 8
          %s231 = scalar_lea.vmem [#allocation2], %s230
          %s233 = ssub.s32 128, 128
          %234 = vsyncadd %s228, %s233
          %s235 = smul.addr %s21, 128
          %s236 = scalar_lea.hbm %s0, %s235
          %s238 = sshll.u32 %s231, 4
          %s239 = int_to_ptr.vmem [resolvable:$true] %s238
          %241 = dma.hbm_to_vmem [thread:$0]  %s236, 128, %s239, %s228
        $region36: #{tpu_custom_call.1} parent=31 // pred_fallthru
          _
        // Predicated region
        $region37: #{tpu_custom_call.1} parent=31 // pred_check
          %p242 = pneg %p67
        $region38: #{tpu_custom_call.1} parent=31 // pred_check_branch
          %244 = sbr.rel (%p242) target = $region40
        $region39: #{tpu_custom_call.1} parent=31 // pred_region
          %s245 = sand.u32 %s21, 1
          %s246 = scalar_lea.sflag [#allocation6], %s245
          %s247 = sand.u32 %s57, 1
          %s248 = smul.addr %s247, 8
          %s249 = scalar_lea.vmem [#allocation5], %s248
          %s251 = ssub.s32 128, 128
          %252 = vsyncadd %s246, %s251
          %s253 = smul.addr %s21, 128
          %s254 = scalar_lea.hbm %s1, %s253
          %s256 = sshll.u32 %s249, 4
          %s257 = int_to_ptr.vmem [resolvable:$true] %s256
          %259 = dma.hbm_to_vmem [thread:$0]  %s254, 128, %s257, %s246
        $region40: #{tpu_custom_call.1} parent=31 // pred_fallthru
          _
      $region32: #{tpu_custom_call.1} parent=5 // pred_fallthru
        _
      %p260 = scmp.le.s32.totalorder 1, %s21
      %p261 = scmp.lt.s32.totalorder %s21, 3
      %p262 = pnand %p260, %p261
      %p263 = pneg %p262
      // Predicated region
      $region41: #{tpu_custom_call.1} parent=5 // pred_check
        _
      $region42: #{tpu_custom_call.1} parent=5 // pred_check_branch
        %265 = sbr.rel (%p262) target = $region44
      $region43: #{tpu_custom_call.1} parent=5 // pred_region
        %s266 = ssub.s32 %s21, 1
        %s267 = sand.u32 %s34, 1
        %s268 = scalar_lea.sflag [#allocation3], %s267
        %s269 = sand.u32 %s34, 1
        %s270 = smul.addr %s269, 8
        %s271 = scalar_lea.vmem [#allocation2], %s270
        // Predicated region
        $region45: #{tpu_custom_call.1} parent=43 // pred_check
          %p272 = pneg %p47
        $region46: #{tpu_custom_call.1} parent=43 // pred_check_branch
          %274 = sbr.rel (%p272) target = $region48
        $region47: #{tpu_custom_call.1} parent=43 // pred_region
          %275 = dma.done %s268, 128
        $region48: #{tpu_custom_call.1} parent=43 // pred_fallthru
          _
        %s276 = sand.u32 %s26, 1
        %s277 = scalar_lea.sflag [#allocation6], %s276
        %s278 = sand.u32 %s60, 1
        %s279 = smul.addr %s278, 8
        %s280 = scalar_lea.vmem [#allocation5], %s279
        // Predicated region
        $region49: #{tpu_custom_call.1} parent=43 // pred_check
          %p281 = pneg %p73
        $region50: #{tpu_custom_call.1} parent=43 // pred_check_branch
          %283 = sbr.rel (%p281) target = $region52
        $region51: #{tpu_custom_call.1} parent=43 // pred_region
          %284 = dma.done %s277, 128
        $region52: #{tpu_custom_call.1} parent=43 // pred_fallthru
          _
        // Predicated region
        $region53: #{tpu_custom_call.1} parent=43 // pred_check
          %p285 = pneg %p94
        $region54: #{tpu_custom_call.1} parent=43 // pred_check_branch
          %287 = sbr.rel (%p285) target = $region56
        $region55: #{tpu_custom_call.1} parent=43 // pred_region
          %288 = dma.done [#allocation6], 512
        $region56: #{tpu_custom_call.1} parent=43 // pred_fallthru
          _
        %s289 = sand.u32 %s34, 1
        %s290 = scalar_lea.sflag [#allocation3], %s289
        %s291 = sand.u32 %s34, 1
        %s292 = smul.addr %s291, 8
        %s293 = scalar_lea.vmem [#allocation2], %s292
        %p294 = pneg %p47
        %p295 = pneg %p44
        %s296 = sand.u32 %s26, 1
        %s297 = scalar_lea.sflag [#allocation6], %s296
        %s298 = sand.u32 %s60, 1
        %s299 = smul.addr %s298, 8
        %s300 = scalar_lea.vmem [#allocation5], %s299
        %p301 = pneg %p73
        %p302 = pneg %p70
        %p303 = pneg %p94
        %p304 = pneg %p91
        %p305 = pneg %p115
        %p306 = pneg %p112
        %p307 = pneg %p136
        %p308 = pneg %p133
        %p309 = pneg %p157
        %p310 = pneg %p154
        %p311 = pneg %p183
        %p312 = pneg %p180
        %s313 = sand.u32 %s170, 1
        %s314 = scalar_lea.sflag [#allocation4], %s313
        %s315 = sand.u32 %s170, 1
        %s316 = smul.addr %s315, 8
        %s317 = scalar_lea.vmem [#allocation8], %s316
        %v318 = vld [vmem:[%s271] sm:$0xff]
        %v319 = vld [vmem:[%s280] sm:$0xff]
        %v320 = vld [vmem:[#allocation7] sm:$0xff]
        %v321 = vld [vmem:[#allocation7 + $0x8] sm:$0xff]
        %v322 = vld [vmem:[#allocation7 + $0x10] sm:$0xff]
        %v323 = vld [vmem:[#allocation7 + $0x18] sm:$0xff]
        %v324 = vld [vmem:[%s3] sm:$0x1]
        %v325 = vld [vmem:[%s4] sm:$0x1]
        %v326 = vld [vmem:[%s5] sm:$0x1]
        %v328 = vlaneseq
        %v329 = vshrl.u32 %v328, 7
        %v330 = vsub.s32 0, %v329
        %v331 = vrot.slane %v324, %v330
        %vm333 = vcmask 261120
        %v335 = vsel %vm333, %v318, 0
        %337 = vmatprep.subr.mxu0 0.0
        %338 = vmatpush1.msra.mxu0 %v320
        %339 = vmatprep.subr.mxu0 0.0
        %340 = vmatpush1.msra.mxu0 %v321
        %341 = vmatprep.subr.mxu0 0.0
        %342 = vmatpush1.msra.mxu0 %v322
        %343 = vmatprep.subr.mxu0 0.0
        %344 = vmatpush1.msra.mxu0 %v323
        %345 = vmatprep.subr.mxu0 0.0
        %346 = vmatpush1.msra.mxu0 0.0
        %347 = vmatprep.subr.mxu0 0.0
        %348 = vmatpush1.msra.mxu0 0.0
        %349 = vmatprep.subr.mxu0 0.0
        %350 = vmatpush1.msra.mxu0 0.0
        %351 = vmatprep.subr.mxu0 0.0
        %352 = vmatpush1.msra.mxu0 0.0
        %353 = vmatprep.subr.mxu0 0.0
        %354 = vmatpush1.msra.mxu0 0.0
        %355 = vmatprep.subr.mxu0 0.0
        %356 = vmatpush1.msra.mxu0 0.0
        %357 = vmatprep.subr.mxu0 0.0
        %358 = vmatpush1.msra.mxu0 0.0
        %359 = vmatprep.subr.mxu0 0.0
        %360 = vmatpush1.msra.mxu0 0.0
        %361 = vmatprep.subr.mxu0 0.0
        %362 = vmatpush1.msra.mxu0 0.0
        %363 = vmatprep.subr.mxu0 0.0
        %364 = vmatpush1.msra.mxu0 0.0
        %365 = vmatprep.subr.mxu0 0.0
        %366 = vmatpush1.msra.mxu0 0.0
        %367 = vmatprep.subr.mxu0 0.0
        %368 = vmatpush1.msra.mxu0 0.0
        %369 = vmatprep.subr.mxu0 0.0
        %370 = vmatpush1.msra.mxu0 0.0
        %371 = vmatprep.subr.mxu0 0.0
        %372 = vmatpush1.msra.mxu0 0.0
        %373 = vmatprep.subr.mxu0 0.0
        %374 = vmatpush1.msra.mxu0 0.0
        %375 = vmatprep.subr.mxu0 0.0
        %376 = vmatpush1.msra.mxu0 0.0
        %377 = vmatprep.subr.mxu0 0.0
        %378 = vmatpush1.msra.mxu0 0.0
        %379 = vmatprep.subr.mxu0 0.0
        %380 = vmatpush1.msra.mxu0 0.0
        %381 = vmatprep.subr.mxu0 0.0
        %382 = vmatpush1.msra.mxu0 0.0
        %383 = vmatprep.subr.mxu0 0.0
        %384 = vmatpush1.msra.mxu0 0.0
        %385 = vmatprep.subr.mxu0 0.0
        %386 = vmatpush1.msra.mxu0 0.0
        %387 = vmatprep.subr.mxu0 0.0
        %388 = vmatpush1.msra.mxu0 0.0
        %389 = vmatprep.subr.mxu0 0.0
        %390 = vmatpush1.msra.mxu0 0.0
        %391 = vmatprep.subr.mxu0 0.0
        %392 = vmatpush1.msra.mxu0 0.0
        %393 = vmatprep.subr.mxu0 0.0
        %394 = vmatpush1.msra.mxu0 0.0
        %395 = vmatprep.subr.mxu0 0.0
        %396 = vmatpush1.msra.mxu0 0.0
        %397 = vmatprep.subr.mxu0 0.0
        %398 = vmatpush1.msra.mxu0 0.0
        %399 = vmatprep.subr.mxu0 0.0
        %400 = vmatpush1.msra.mxu0 0.0
        %401 = vmatprep.mubr.f32.mxu0 0.0
        %402 = vmatmul.mubr.f32.gmra.mrb[0].mxu0 %v335
        %v403 = vpop.f32.mrb[0].mxu0
        %v404 = vadd.f32 %v331, %v403
        %v405 = vpop.f32.mrb[0].mxu0
        %406 = vdwg.mxu0
        %v407 = vadd.f32 %v404, %v319
        %v408 = vsel %vm333, %v407, 0.0
        %409 = vadd.xlane.f32.xlu0 %v408
        %v410 = vpop.xlane.xlu0 %409
        %v411 = vrcp.pop 32.0
        %v412 = vmul.f32 %v410, %v411
        %v413 = vsub.f32 %v407, %v412
        %v414 = vmul.f32 %v413, %v413
        %v415 = vsel %vm333, %v414, 0.0
        %416 = vadd.xlane.f32.xlu0 %v415
        %v417 = vpop.xlane.xlu0 %416
        %v418 = vmul.f32 %v417, %v411
        %v419 = vadd.f32 %v418, 1e-12
        %v420 = vrsqrt.pop %v419
        %v421 = vmul.f32 %v413, %v420
        %v423 = vlaneseq
        %v424 = vshrl.u32 %v423, 7
        %v425 = vsub.s32 0, %v424
        %v426 = vrot.slane %v325, %v425
        %v428 = vmul.f32 %v421, %v426
        %v430 = vlaneseq
        %v431 = vshrl.u32 %v430, 7
        %v432 = vsub.s32 0, %v431
        %v433 = vrot.slane %v326, %v432
        %v435 = vadd.f32 %v428, %v433
        %436 = vst.msk [vmem:[%s317] sm:$0xff] %vm333, %v435
        %s437 = sand.u32 %s170, 1
        %s438 = scalar_lea.sflag [#allocation4], %s437
        %s439 = sand.u32 %s170, 1
        %s440 = smul.addr %s439, 8
        %s441 = scalar_lea.vmem [#allocation8], %s440
        // Predicated region
        $region57: #{tpu_custom_call.1} parent=43 // pred_check
          %p442 = pneg %p180
        $region58: #{tpu_custom_call.1} parent=43 // pred_check_branch
          %444 = sbr.rel (%p442) target = $region60
        $region59: #{tpu_custom_call.1} parent=43 // pred_region
          %s446 = ssub.s32 128, 128
          %447 = vsyncadd %s438, %s446
          %s448 = smul.addr %s26, 128
          %s449 = scalar_lea.hbm %s6, %s448
          %s451 = sshll.u32 %s441, 4
          %s452 = int_to_ptr.vmem [resolvable:$true] %s451
          %454 = dma.vmem_to_hbm [thread:$0]  %s452, 128, %s449, %s438
        $region60: #{tpu_custom_call.1} parent=43 // pred_fallthru
          _
      $region44: #{tpu_custom_call.1} parent=5 // pred_fallthru
        _
      %p455 = scmp.le.s32.totalorder 2, %s21
      // Predicated region
      $region61: #{tpu_custom_call.1} parent=5 // pred_check
        %p456 = pneg %p455
      $region62: #{tpu_custom_call.1} parent=5 // pred_check_branch
        %458 = sbr.rel (%p456) target = $region64
      $region63: #{tpu_custom_call.1} parent=5 // pred_region
        %s459 = ssub.s32 %s21, 2
        // Predicated region
        $region65: #{tpu_custom_call.1} parent=63 // pred_check
          %p460 = pneg %p186
        $region66: #{tpu_custom_call.1} parent=63 // pred_check_branch
          %462 = sbr.rel (%p460) target = $region68
        $region67: #{tpu_custom_call.1} parent=63 // pred_region
          %s463 = sand.u32 %s171, 1
          %s464 = scalar_lea.sflag [#allocation4], %s463
          %s465 = sand.u32 %s171, 1
          %s466 = smul.addr %s465, 8
          %s467 = scalar_lea.vmem [#allocation8], %s466
          %468 = dma.done %s464, 128
        $region68: #{tpu_custom_call.1} parent=63 // pred_fallthru
          _
      $region64: #{tpu_custom_call.1} parent=5 // pred_fallthru
        _
    $region6: #{tpu_custom_call.1} parent=1 // loop_footer
      %s25 = sadd.s32 1, %s21
    $region7: #{tpu_custom_call.1} parent=1 // loop_footer_branch
      %20 = sbr.rel target = $region3
    $region8: #{tpu_custom_call.1} parent=1 // loop_exit
      _
    %469 = vsyncpa [#allocation3], 1
    %s470 = scalar_lea.sflag [#allocation3], 1
    %471 = vsyncpa %s470, 1
    %472 = vsyncpa [#allocation6], 1
    %s473 = scalar_lea.sflag [#allocation6], 1
    %474 = vsyncpa %s473, 1
    %475 = vsyncpa [#allocation4], 1
    %s476 = scalar_lea.sflag [#allocation4], 1
    %477 = vsyncpa %s476, 1

</llo_original>
